<compile_context>
chip_gen: v6e
topology: v6e:2x2x1
jax: 0.10.0
libtpu: 0.0.40
codegen_flags: <defaults>
</compile_context>

<pallas_src>
import functools

import jax
import jax.numpy as jnp
from jax import lax
from jax.experimental import pallas as pl
from jax.experimental.pallas import tpu as pltpu

EPS = 1e-5
LANES = 128


def _stats_kernel(p_ref, w_ref, g_ref, b_ref, stat_ref, sum_ref, ssq_ref, *, n_rows):
    # p_ref:    (block_rows, Kc)      bf16 im2col patch tile
    # w_ref:    (Kc, Cout_pad)        bf16 weights
    # g_ref:    (1, Cout_pad)         f32 BN gamma
    # b_ref:    (1, Cout_pad)         f32 BN beta
    # stat_ref: (2, Cout_pad)         f32 output: row0 = scale, row1 = shift
    # sum_ref/ssq_ref: (1, Cout_pad)  f32 scratch accumulators
    i = pl.program_id(0)

    @pl.when(i == 0)
    def _init():
        sum_ref[...] = jnp.zeros_like(sum_ref)
        ssq_ref[...] = jnp.zeros_like(ssq_ref)
        stat_ref[...] = jnp.zeros_like(stat_ref)

    # One deep MXU contraction per tile (K = KH*KW*Cin), f32 accumulation.
    y = jnp.dot(p_ref[...], w_ref[...], preferred_element_type=jnp.float32)
    sum_ref[...] += jnp.sum(y, axis=0, keepdims=True)
    ssq_ref[...] += jnp.sum(y * y, axis=0, keepdims=True)

    @pl.when(i == pl.num_programs(0) - 1)
    def _finalize():
        inv_n = 1.0 / float(n_rows)          # divide by TRUE row count
        mean = sum_ref[...] * inv_n
        var = ssq_ref[...] * inv_n - mean * mean   # biased variance (PyTorch training BN)
        inv = lax.rsqrt(var + EPS)
        scale = g_ref[...] * inv
        shift = b_ref[...] - mean * scale
        stat_ref[0:1, :] = scale
        stat_ref[1:2, :] = shift


def _norm_kernel(p_ref, w_ref, stat_ref, o_ref):
    # p_ref: (block_rows, Kc) bf16; w_ref: (Kc, Cout_pad) bf16
    # stat_ref: (2, Cout_pad) f32 fused scale/shift; o_ref: (block_rows, Cout_pad) f32
    y = jnp.dot(p_ref[...], w_ref[...], preferred_element_type=jnp.float32)
    y = y * stat_ref[0:1, :] + stat_ref[1:2, :]
    o_ref[...] = jnp.maximum(y, 0.0).astype(o_ref.dtype)


def conv_batchnorm_relu(x_nchw, weight, gamma, beta, *, padding=1, block_rows=512):
    """x_nchw: (N, Cin, H, W); weight: (Cout, Cin, KH, KW). Returns NCHW f32."""
    N, Cin, H, W = x_nchw.shape
    Cout, _, KH, KW = weight.shape

    Ho = H + 2 * padding - KH + 1
    Wo = W + 2 * padding - KW + 1
    rows = N * Ho * Wo
    kc = KH * KW * Cin

    # ---------------- glue: layout / im2col / lane padding -------------------
    x_nhwc = jnp.transpose(x_nchw, (0, 2, 3, 1)).astype(jnp.bfloat16)
    x_pad = jnp.pad(x_nhwc, ((0, 0), (padding, padding), (padding, padding), (0, 0)))
    # im2col: (N*Ho*Wo, KH*KW*Cin), tap-major (i, j) then channel.
    taps = [x_pad[:, i:i + Ho, j:j + Wo, :] for i in range(KH) for j in range(KW)]
    patches = jnp.concatenate(taps, axis=-1).reshape(rows, kc)

    # Row tiling (multiple of 8); pad rows with zeros (exactly neutral for BN sums).
    block_rows = max(8, (min(block_rows, rows) + 7) // 8 * 8)
    nt = -(-rows // block_rows)
    rows_pad = nt * block_rows
    if rows_pad != rows:
        patches = jnp.pad(patches, ((0, rows_pad - rows), (0, 0)))

    # Lane-dense output channels: pad Cout -> multiple of 128 with zeros.
    cout_pad = -(-Cout // LANES) * LANES
    w_mat = jnp.transpose(weight, (2, 3, 1, 0)).reshape(kc, Cout).astype(jnp.bfloat16)
    w_mat = jnp.pad(w_mat, ((0, 0), (0, cout_pad - Cout)))
    gamma2 = jnp.pad(gamma.reshape(1, Cout).astype(jnp.float32),
                     ((0, 0), (0, cout_pad - Cout)))
    beta2 = jnp.pad(beta.reshape(1, Cout).astype(jnp.float32),
                    ((0, 0), (0, cout_pad - Cout)))
    # Conv bias is zero-initialized in the module -> omitted (a constant bias would
    # cancel through the BN mean subtraction anyway).

    row_spec = pl.BlockSpec((block_rows, kc), lambda i: (i, 0))
    full = lambda shape: pl.BlockSpec(shape, lambda i: (0, 0))

    patch_bytes = rows_pad * kc * 2
    w_bytes = kc * cout_pad * 2

    # --------- pass 1: streamed stats -> fused BN scale/shift (2, cout_pad) ---------
    stats = pl.pallas_call(
        functools.partial(_stats_kernel, n_rows=rows),
        out_shape=jax.ShapeDtypeStruct((2, cout_pad), jnp.float32),
        grid=(nt,),
        in_specs=[row_spec,
                  full((kc, cout_pad)),
                  full((1, cout_pad)),
                  full((1, cout_pad))],
        out_specs=full((2, cout_pad)),
        scratch_shapes=[pltpu.VMEM((1, cout_pad), jnp.float32),
                        pltpu.VMEM((1, cout_pad), jnp.float32)],
        compiler_params=pltpu.CompilerParams(
            dimension_semantics=("arbitrary",)),   # sequential reduction into scratch
        cost_estimate=pl.CostEstimate(
            flops=2 * rows_pad * kc * cout_pad,
            transcendentals=cout_pad,
            bytes_accessed=patch_bytes + w_bytes + 2 * cout_pad * 4),
    )(patches, w_mat, gamma2, beta2)

    # --------- pass 2: conv (recomputed, MXU-cheap) + BN affine + ReLU ---------
    out_rows = pl.pallas_call(
        _norm_kernel,
        out_shape=jax.ShapeDtypeStruct((rows_pad, cout_pad), jnp.float32),
        grid=(nt,),
        in_specs=[row_spec,
                  full((kc, cout_pad)),
                  full((2, cout_pad))],
        out_specs=pl.BlockSpec((block_rows, cout_pad), lambda i: (i, 0)),
        compiler_params=pltpu.CompilerParams(
            dimension_semantics=("parallel",)),    # independent row tiles -> megacore
        cost_estimate=pl.CostEstimate(
            flops=2 * rows_pad * kc * cout_pad,
            transcendentals=0,
            bytes_accessed=patch_bytes + w_bytes + rows_pad * cout_pad * 4),
    )(patches, w_mat, stats)

    # glue: drop row/channel padding, rows -> NHWC -> NCHW.
    out_nhwc = out_rows[:rows, :Cout].reshape(N, Ho, Wo, Cout)
    return jnp.transpose(out_nhwc, (0, 3, 1, 2))


def _reference(x_nchw, weight, gamma, beta, *, padding=1):
    """Plain-JAX reference (inputs rounded to bf16 to match the kernel's MXU inputs)."""
    xb = x_nchw.astype(jnp.bfloat16).astype(jnp.float32)
    wb = weight.astype(jnp.bfloat16).astype(jnp.float32)
    y = lax.conv_general_dilated(
        xb, wb, window_strides=(1, 1),
        padding=[(padding, padding), (padding, padding)],
        dimension_numbers=("NCHW", "OIHW", "NCHW"))
    mean = jnp.mean(y, axis=(0, 2, 3), keepdims=True)
    var = jnp.mean((y - mean) ** 2, axis=(0, 2, 3), keepdims=True)
    yn = (y - mean) * lax.rsqrt(var + EPS)
    yn = yn * gamma.reshape(1, -1, 1, 1) + beta.reshape(1, -1, 1, 1)
    return jnp.maximum(yn, 0.0)


if __name__ == "__main__":
    key = jax.random.PRNGKey(0)
    k_x, k_w = jax.random.split(key)

    # Small shapes consistent with the module: N=2, Cin=4, H=W=16, Cout=8, k=3.
    N, Cin, H, W = 2, 4, 16, 16
    Cout, K = 8, 3

    x = jax.random.normal(k_x, (N, Cin, H, W), dtype=jnp.float32)

    fan_in = Cin * K * K
    bound = 1.0 / (fan_in ** 0.5)
    weight = jax.random.uniform(k_w, (Cout, Cin, K, K),
                                minval=-bound, maxval=bound, dtype=jnp.float32)
    gamma = jnp.ones((Cout,), jnp.float32)   # BatchNorm weight default
    beta = jnp.zeros((Cout,), jnp.float32)   # BatchNorm bias default

    # block_rows=128 at this small size -> a 4-step grid, exercising the streamed
    # stats accumulation.  Production default is 512 (review-suggested 512-2048).
    out = conv_batchnorm_relu(x, weight, gamma, beta, block_rows=128)
    out = jax.block_until_ready(out)

    ref = _reference(x, weight, gamma, beta)
    assert out.shape == (N, Cout, H, W)
    assert jnp.allclose(out, ref, atol=2e-3, rtol=2e-3), float(jnp.max(jnp.abs(out - ref)))

    print("KERNEL_OK")
</pallas_src>

<mosaic_0001>
module attributes {stable_mosaic.version = 11 : i64} {
  func.func @_stats_kernel(%arg0: i32, %arg1: memref<128x36xbf16, #tpu.memory_space<vmem>>, %arg2: memref<36x128xbf16, #tpu.memory_space<vmem>>, %arg3: memref<1x128xf32, #tpu.memory_space<vmem>>, %arg4: memref<1x128xf32, #tpu.memory_space<vmem>>, %arg5: memref<2x128xf32, #tpu.memory_space<vmem>>, %arg6: memref<1x128xf32, #tpu.memory_space<vmem>>, %arg7: memref<1x128xf32, #tpu.memory_space<vmem>>) attributes {dimension_semantics = [#tpu.dimension_semantics<arbitrary>], iteration_bounds = array<i64: 4>, scalar_prefetch = 0 : i64, scratch_operands = 2 : i64, tpu.core_type = #tpu.core_type<tc>, window_params = [{transform_indices = @transform_0, window_bounds = array<i64: 128, 36>}, {pipeline_mode = #tpu.pipeline_mode<synchronous>, transform_indices = @transform_1, window_bounds = array<i64: 36, 128>}, {pipeline_mode = #tpu.pipeline_mode<synchronous>, transform_indices = @transform_2, window_bounds = array<i64: 1, 128>}, {pipeline_mode = #tpu.pipeline_mode<synchronous>, transform_indices = @transform_3, window_bounds = array<i64: 1, 128>}, {pipeline_mode = #tpu.pipeline_mode<synchronous>, transform_indices = @transform_4, window_bounds = array<i64: 2, 128>}]} {
    %c0_i32 = arith.constant 0 : i32
    %0 = arith.cmpi eq, %arg0, %c0_i32 : i32
    %1 = arith.extui %0 : i1 to i32
    %c0_i32_0 = arith.constant 0 : i32
    %2 = arith.cmpi ne, %1, %c0_i32_0 : i32
    scf.if %2 {
      %cst_15 = arith.constant 0.000000e+00 : f32
      %20 = vector.broadcast %cst_15 : f32 to vector<1x128xf32>
      %c0_16 = arith.constant 0 : index
      %c0_17 = arith.constant 0 : index
      %21 = vector.load %arg6[%c0_16, %c0_17] : memref<1x128xf32, #tpu.memory_space<vmem>>, vector<1x128xf32>
      tpu.vector_store %arg6[%c0_16, %c0_17], %20 {strides = array<i32>} : memref<1x128xf32, #tpu.memory_space<vmem>>, vector<1x128xf32>,
      %cst_18 = arith.constant 0.000000e+00 : f32
      %22 = vector.broadcast %cst_18 : f32 to vector<1x128xf32>
      %c0_19 = arith.constant 0 : index
      %c0_20 = arith.constant 0 : index
      %23 = vector.load %arg7[%c0_19, %c0_20] : memref<1x128xf32, #tpu.memory_space<vmem>>, vector<1x128xf32>
      tpu.vector_store %arg7[%c0_19, %c0_20], %22 {strides = array<i32>} : memref<1x128xf32, #tpu.memory_space<vmem>>, vector<1x128xf32>,
      %cst_21 = arith.constant 0.000000e+00 : f32
      %24 = vector.broadcast %cst_21 : f32 to vector<2x128xf32>
      %c0_22 = arith.constant 0 : index
      %c0_23 = arith.constant 0 : index
      %25 = vector.load %arg5[%c0_22, %c0_23] : memref<2x128xf32, #tpu.memory_space<vmem>>, vector<2x128xf32>
      tpu.vector_store %arg5[%c0_22, %c0_23], %24 {strides = array<i32>} : memref<2x128xf32, #tpu.memory_space<vmem>>, vector<2x128xf32>,
    } else {
    }
    %c0 = arith.constant 0 : index
    %c0_1 = arith.constant 0 : index
    %3 = vector.load %arg1[%c0, %c0_1] : memref<128x36xbf16, #tpu.memory_space<vmem>>, vector<128x36xbf16>
    %c0_2 = arith.constant 0 : index
    %c0_3 = arith.constant 0 : index
    %4 = vector.load %arg2[%c0_2, %c0_3] : memref<36x128xbf16, #tpu.memory_space<vmem>>, vector<36x128xbf16>
    %cst = arith.constant dense<0.000000e+00> : vector<128x128xf32>
    %5 = tpu.matmul %3, %4, %cst {dimension_numbers = #tpu.dot_dimension_numbers<[1], [0], [0], [1], [0, 0, 1, 1], [], []>} : vector<128x36xbf16>, vector<36x128xbf16>, vector<128x128xf32> -> vector<128x128xf32>
    %c0_4 = arith.constant 0 : index
    %c0_5 = arith.constant 0 : index
    %6 = vector.load %arg6[%c0_4, %c0_5] : memref<1x128xf32, #tpu.memory_space<vmem>>, vector<1x128xf32>
    %cst_6 = arith.constant dense<0.000000e+00> : vector<128xf32>
    %7 = vector.multi_reduction <add>, %5, %cst_6 [0] : vector<128x128xf32> to vector<128xf32>
    %8 = vector.shape_cast %7 : vector<128xf32> to vector<1x128xf32>
    %9 = arith.addf %6, %8 : vector<1x128xf32>
    %c0_7 = arith.constant 0 : index
    %c0_8 = arith.constant 0 : index
    %10 = vector.load %arg6[%c0_7, %c0_8] : memref<1x128xf32, #tpu.memory_space<vmem>>, vector<1x128xf32>
    tpu.vector_store %arg6[%c0_7, %c0_8], %9 {strides = array<i32>} : memref<1x128xf32, #tpu.memory_space<vmem>>, vector<1x128xf32>,
    %c0_9 = arith.constant 0 : index
    %c0_10 = arith.constant 0 : index
    %11 = vector.load %arg7[%c0_9, %c0_10] : memref<1x128xf32, #tpu.memory_space<vmem>>, vector<1x128xf32>
    %12 = arith.mulf %5, %5 : vector<128x128xf32>
    %cst_11 = arith.constant dense<0.000000e+00> : vector<128xf32>
    %13 = vector.multi_reduction <add>, %12, %cst_11 [0] : vector<128x128xf32> to vector<128xf32>
    %14 = vector.shape_cast %13 : vector<128xf32> to vector<1x128xf32>
    %15 = arith.addf %11, %14 : vector<1x128xf32>
    %c0_12 = arith.constant 0 : index
    %c0_13 = arith.constant 0 : index
    %16 = vector.load %arg7[%c0_12, %c0_13] : memref<1x128xf32, #tpu.memory_space<vmem>>, vector<1x128xf32>
    tpu.vector_store %arg7[%c0_12, %c0_13], %15 {strides = array<i32>} : memref<1x128xf32, #tpu.memory_space<vmem>>, vector<1x128xf32>,
    %c3_i32 = arith.constant 3 : i32
    %17 = arith.cmpi eq, %arg0, %c3_i32 : i32
    %18 = arith.extui %17 : i1 to i32
    %c0_i32_14 = arith.constant 0 : i32
    %19 = arith.cmpi ne, %18, %c0_i32_14 : i32
    scf.if %19 {
      %c0_15 = arith.constant 0 : index
      %c0_16 = arith.constant 0 : index
      %20 = vector.load %arg6[%c0_15, %c0_16] : memref<1x128xf32, #tpu.memory_space<vmem>>, vector<1x128xf32>
      %cst_17 = arith.constant 0.001953125 : f32
      %21 = vector.broadcast %cst_17 : f32 to vector<1x128xf32>
      %22 = arith.mulf %20, %21 : vector<1x128xf32>
      %c0_18 = arith.constant 0 : index
      %c0_19 = arith.constant 0 : index
      %23 = vector.load %arg7[%c0_18, %c0_19] : memref<1x128xf32, #tpu.memory_space<vmem>>, vector<1x128xf32>
      %cst_20 = arith.constant 0.001953125 : f32
      %24 = vector.broadcast %cst_20 : f32 to vector<1x128xf32>
      %25 = arith.mulf %23, %24 : vector<1x128xf32>
      %26 = arith.mulf %22, %22 : vector<1x128xf32>
      %27 = arith.subf %25, %26 : vector<1x128xf32>
      %cst_21 = arith.constant 9.99999974E-6 : f32
      %28 = vector.broadcast %cst_21 : f32 to vector<1x128xf32>
      %29 = arith.addf %27, %28 : vector<1x128xf32>
      %30 = math.rsqrt %29 : vector<1x128xf32>
      %c0_22 = arith.constant 0 : index
      %c0_23 = arith.constant 0 : index
      %31 = vector.load %arg3[%c0_22, %c0_23] : memref<1x128xf32, #tpu.memory_space<vmem>>, vector<1x128xf32>
      %32 = arith.mulf %31, %30 : vector<1x128xf32>
      %c0_24 = arith.constant 0 : index
      %c0_25 = arith.constant 0 : index
      %33 = vector.load %arg4[%c0_24, %c0_25] : memref<1x128xf32, #tpu.memory_space<vmem>>, vector<1x128xf32>
      %34 = arith.mulf %22, %32 : vector<1x128xf32>
      %35 = arith.subf %33, %34 : vector<1x128xf32>
      %c0_26 = arith.constant 0 : index
      %c0_27 = arith.constant 0 : index
      %36 = vector.load %arg5[%c0_26, %c0_27] : memref<2x128xf32, #tpu.memory_space<vmem>>, vector<1x128xf32>
      tpu.vector_store %arg5[%c0_26, %c0_27], %32 {strides = array<i32>} : memref<2x128xf32, #tpu.memory_space<vmem>>, vector<1x128xf32>,
      %c1 = arith.constant 1 : index
      %c0_28 = arith.constant 0 : index
      %37 = vector.load %arg5[%c1, %c0_28] : memref<2x128xf32, #tpu.memory_space<vmem>>, vector<1x128xf32>
      tpu.vector_store %arg5[%c1, %c0_28], %35 {strides = array<i32>} : memref<2x128xf32, #tpu.memory_space<vmem>>, vector<1x128xf32>,
    } else {
    }
    return
  }
  func.func @transform_0(%arg0: i32) -> (i32, i32) {
    %c0_i32 = arith.constant 0 : i32
    %c0_i32_0 = arith.constant 0 : i32
    return %arg0, %c0_i32 : i32, i32
  }
  func.func @transform_1(%arg0: i32) -> (i32, i32) {
    %c0_i32 = arith.constant 0 : i32
    %c0_i32_0 = arith.constant 0 : i32
    %c0_i32_1 = arith.constant 0 : i32
    return %c0_i32, %c0_i32_0 : i32, i32
  }
  func.func @transform_2(%arg0: i32) -> (i32, i32) {
    %c0_i32 = arith.constant 0 : i32
    %c0_i32_0 = arith.constant 0 : i32
    %c0_i32_1 = arith.constant 0 : i32
    return %c0_i32, %c0_i32_0 : i32, i32
  }
  func.func @transform_3(%arg0: i32) -> (i32, i32) {
    %c0_i32 = arith.constant 0 : i32
    %c0_i32_0 = arith.constant 0 : i32
    %c0_i32_1 = arith.constant 0 : i32
    return %c0_i32, %c0_i32_0 : i32, i32
  }
  func.func @transform_4(%arg0: i32) -> (i32, i32) {
    %c0_i32 = arith.constant 0 : i32
    %c0_i32_0 = arith.constant 0 : i32
    %c0_i32_1 = arith.constant 0 : i32
    return %c0_i32, %c0_i32_0 : i32, i32
  }
}

</mosaic_0001>

<llo_original>
// kernel: tpu_custom_call.1
$region0: #{tpu_custom_call.1}
  #allocation0 [shape = 'u32[]', space=smem, size = 0x4, offset = 0x4, fixed_abs, tag = 'smem constant byte address 0x4 - core index']
  #allocation1 [shape = 'u32[144,128]{1,0:T(1,128)}', space=vmem, size = 0x12000, scoped, tag = 'internal scratch']
  #allocation2 [shape = 'f32[1,128]{1,0:T(1,128)}', space=vmem, size = 0x200, scoped, tag = 'scratch operand']
  #allocation3 [shape = 'f32[1,128]{1,0:T(1,128)}', space=vmem, size = 0x200, scoped, tag = 'scratch operand']
  %s0 = inlined_call_operand.vmem [shape: bf16[512,36], index: 0, kind: input, shape index: {}]
  %s1 = inlined_call_operand.vmem [shape: bf16[36,128], index: 1, kind: input, shape index: {}]
  %s2 = inlined_call_operand.vmem [shape: f32[1,128], index: 2, kind: input, shape index: {}]
  %s3 = inlined_call_operand.vmem [shape: f32[1,128], index: 3, kind: input, shape index: {}]
  %s4 = inlined_call_operand.hbm [shape: f32[2,128], index: 4, kind: output, shape index: {}]
  %s5 = sld [smem:[#allocation0]]
  $region57: #{tpu_custom_call.1} parent=0
    _
  %s7 = ssub.s32 1, %s5
  %s8 = scalar_select 0, %s7, %s5
  $region1: #{tpu_custom_call.1} parent=0
    #allocation4 [shape = 'u8[1024]{0}', space=vmem, size = 0x400, scoped, tag = 'output window, operand 0, single buffered']
    #allocation5 [shape = 's32[2]{0}', space=sflag, size = 0x8, scoped, tag = 'scoped memory for tpu_custom_call.1']
    %9 = vsyncpa [#allocation5], 0
    loop: start=0, step=1, limit=6
    $region2: #{tpu_custom_call.1} parent=1 // loop_pre_header
      _
    $region3: #{tpu_custom_call.1} parent=1 // loop_header
      %s11 = sphi 0, %s15
      %p12 = scmp.ge.s32.totalorder %s11, 6
      %s21 = sphi 0, %s23
      %s24 = sphi 0, %s21
      %s25 = sphi 0, %s24
      %s41 = sphi 0, %s25
      %s45 = sphi 0, %s45
      %s47 = sphi 0, %s45
      %s48 = sphi 0, %s47
      %s62 = sphi 0, %s48
      %s66 = sphi 0, %s66
      %s68 = sphi 0, %s66
      %s69 = sphi 0, %s68
      %s83 = sphi 0, %s69
      %s87 = sphi 0, %s87
      %s89 = sphi 0, %s87
      %s90 = sphi 0, %s89
      %s104 = sphi 0, %s90
      %s108 = sphi 0, %s108
      %s110 = sphi 0, %s108
      %s111 = sphi 0, %s110
      %s125 = sphi 0, %s111
    $region4: #{tpu_custom_call.1} parent=1 // loop_header_branch
      %14 = sbr.rel (%p12) target = $region8
    $region5: #{tpu_custom_call.1} parent=1 // loop_body
      %s16 = ssub.s32 %s11, 1
      %s17 = ssub.s32 %s11, 2
      %s18 = sadd.s32 %s11, 1
      %s19 = ssub.s32 %s11, %s18
      %p20 = scmp.eq.s32.totalorder %s19, 0
      %s22 = sadd.s32 %s21, 1
      %s23 = scalar_select %p20, %s21, %s22
      %p26 = pneg %p20
      %p27 = scmp.eq.s32.totalorder %s11, 3
      %p28 = por %p26, %p27
      %p29 = scmp.ne.s32.totalorder %s21, %s24
      %p30 = scmp.eq.s32.totalorder %s11, 0
      %p31 = por %p29, %p30
      %p32 = scmp.ne.s32.totalorder %s21, %s24
      %p33 = scmp.eq.s32.totalorder %s16, 3
      %p34 = por %p32, %p33
      %p35 = scmp.ne.s32.totalorder %s24, %s25
      %p36 = scmp.eq.s32.totalorder %s16, 0
      %p37 = por %p35, %p36
      %p38 = scmp.ne.s32.totalorder %s24, %s25
      %p39 = scmp.eq.s32.totalorder %s17, 3
      %p40 = por %p38, %p39
      %p42 = scmp.ne.s32.totalorder %s25, %s41
      %p43 = scmp.eq.s32.totalorder %s17, 0
      %p44 = por %p42, %p43
      %s46 = sadd.s32 %s45, 1
      %p49 = scmp.eq.s32.totalorder %s11, 3
      %p50 = scmp.ne.s32.totalorder %s45, %s47
      %p51 = scmp.eq.s32.totalorder %s11, 0
      %p52 = por %p50, %p51
      %p53 = scmp.ne.s32.totalorder %s45, %s47
      %p54 = scmp.eq.s32.totalorder %s16, 3
      %p55 = por %p53, %p54
      %p56 = scmp.ne.s32.totalorder %s47, %s48
      %p57 = scmp.eq.s32.totalorder %s16, 0
      %p58 = por %p56, %p57
      %p59 = scmp.ne.s32.totalorder %s47, %s48
      %p60 = scmp.eq.s32.totalorder %s17, 3
      %p61 = por %p59, %p60
      %p63 = scmp.ne.s32.totalorder %s48, %s62
      %p64 = scmp.eq.s32.totalorder %s17, 0
      %p65 = por %p63, %p64
      %s67 = sadd.s32 %s66, 1
      %p70 = scmp.eq.s32.totalorder %s11, 3
      %p71 = scmp.ne.s32.totalorder %s66, %s68
      %p72 = scmp.eq.s32.totalorder %s11, 0
      %p73 = por %p71, %p72
      %p74 = scmp.ne.s32.totalorder %s66, %s68
      %p75 = scmp.eq.s32.totalorder %s16, 3
      %p76 = por %p74, %p75
      %p77 = scmp.ne.s32.totalorder %s68, %s69
      %p78 = scmp.eq.s32.totalorder %s16, 0
      %p79 = por %p77, %p78
      %p80 = scmp.ne.s32.totalorder %s68, %s69
      %p81 = scmp.eq.s32.totalorder %s17, 3
      %p82 = por %p80, %p81
      %p84 = scmp.ne.s32.totalorder %s69, %s83
      %p85 = scmp.eq.s32.totalorder %s17, 0
      %p86 = por %p84, %p85
      %s88 = sadd.s32 %s87, 1
      %p91 = scmp.eq.s32.totalorder %s11, 3
      %p92 = scmp.ne.s32.totalorder %s87, %s89
      %p93 = scmp.eq.s32.totalorder %s11, 0
      %p94 = por %p92, %p93
      %p95 = scmp.ne.s32.totalorder %s87, %s89
      %p96 = scmp.eq.s32.totalorder %s16, 3
      %p97 = por %p95, %p96
      %p98 = scmp.ne.s32.totalorder %s89, %s90
      %p99 = scmp.eq.s32.totalorder %s16, 0
      %p100 = por %p98, %p99
      %p101 = scmp.ne.s32.totalorder %s89, %s90
      %p102 = scmp.eq.s32.totalorder %s17, 3
      %p103 = por %p101, %p102
      %p105 = scmp.ne.s32.totalorder %s90, %s104
      %p106 = scmp.eq.s32.totalorder %s17, 0
      %p107 = por %p105, %p106
      %s109 = sadd.s32 %s108, 1
      %p112 = scmp.eq.s32.totalorder %s11, 3
      %p113 = scmp.ne.s32.totalorder %s108, %s110
      %p114 = scmp.eq.s32.totalorder %s11, 0
      %p115 = por %p113, %p114
      %p116 = scmp.ne.s32.totalorder %s108, %s110
      %p117 = scmp.eq.s32.totalorder %s16, 3
      %p118 = por %p116, %p117
      %p119 = scmp.ne.s32.totalorder %s110, %s111
      %p120 = scmp.eq.s32.totalorder %s16, 0
      %p121 = por %p119, %p120
      %p122 = scmp.ne.s32.totalorder %s110, %s111
      %p123 = scmp.eq.s32.totalorder %s17, 3
      %p124 = por %p122, %p123
      %p126 = scmp.ne.s32.totalorder %s111, %s125
      %p127 = scmp.eq.s32.totalorder %s17, 0
      %p128 = por %p126, %p127
      %p129 = scmp.le.s32.totalorder 1, %s11
      %p130 = scmp.lt.s32.totalorder %s11, 5
      %p131 = pnand %p129, %p130
      %p132 = pneg %p131
      // Predicated region
      $region9: #{tpu_custom_call.1} parent=5 // pred_check
        _
      $region10: #{tpu_custom_call.1} parent=5 // pred_check_branch
        %134 = sbr.rel (%p131) target = $region12
      $region11: #{tpu_custom_call.1} parent=5 // pred_region
        %s135 = ssub.s32 %s11, 1
        // Predicated region
        $region13: #{tpu_custom_call.1} parent=11 // pred_check
          %p136 = pneg %p58
        $region14: #{tpu_custom_call.1} parent=11 // pred_check_branch
          %138 = sbr.rel (%p136) target = $region16
        $region15: #{tpu_custom_call.1} parent=11 // pred_region
          _
        $region16: #{tpu_custom_call.1} parent=11 // pred_fallthru
          _
        // Predicated region
        $region17: #{tpu_custom_call.1} parent=11 // pred_check
          %p139 = pneg %p79
        $region18: #{tpu_custom_call.1} parent=11 // pred_check_branch
          %141 = sbr.rel (%p139) target = $region20
        $region19: #{tpu_custom_call.1} parent=11 // pred_region
          _
        $region20: #{tpu_custom_call.1} parent=11 // pred_fallthru
          _
        // Predicated region
        $region21: #{tpu_custom_call.1} parent=11 // pred_check
          %p142 = pneg %p100
        $region22: #{tpu_custom_call.1} parent=11 // pred_check_branch
          %144 = sbr.rel (%p142) target = $region24
        $region23: #{tpu_custom_call.1} parent=11 // pred_region
          _
        $region24: #{tpu_custom_call.1} parent=11 // pred_fallthru
          _
      $region12: #{tpu_custom_call.1} parent=5 // pred_fallthru
        _
      %p145 = scmp.lt.s32.totalorder %s11, 4
      // Predicated region
      $region25: #{tpu_custom_call.1} parent=5 // pred_check
        %p146 = pneg %p145
      $region26: #{tpu_custom_call.1} parent=5 // pred_check_branch
        %148 = sbr.rel (%p146) target = $region28
      $region27: #{tpu_custom_call.1} parent=5 // pred_region
        // Predicated region
        $region29: #{tpu_custom_call.1} parent=27 // pred_check
          %p149 = pneg %p31
        $region30: #{tpu_custom_call.1} parent=27 // pred_check_branch
          %151 = sbr.rel (%p149) target = $region32
        $region31: #{tpu_custom_call.1} parent=27 // pred_region
          %s152 = smul.u32 16, %s11
          %p153 = scmp.lt.s32.totalorder %s152, 63
          %s154 = scalar_select %p153, %s152, 63
          %s155 = smul.addr %s154, 4
          %s156 = scalar_lea.vmem %s0, %s155
          %s157 = smul.u32 16, %s11
        $region32: #{tpu_custom_call.1} parent=27 // pred_fallthru
          _
      $region28: #{tpu_custom_call.1} parent=5 // pred_fallthru
        _
      %p158 = scmp.le.s32.totalorder 1, %s11
      %p159 = scmp.lt.s32.totalorder %s11, 5
      %p160 = pnand %p158, %p159
      %p161 = pneg %p160
      // Predicated region
      $region33: #{tpu_custom_call.1} parent=5 // pred_check
        _
      $region34: #{tpu_custom_call.1} parent=5 // pred_check_branch
        %163 = sbr.rel (%p160) target = $region36
      $region35: #{tpu_custom_call.1} parent=5 // pred_region
        %s164 = ssub.s32 %s11, 1
        %s165 = smul.u32 16, %s16
        %p166 = scmp.lt.s32.totalorder %s165, 63
        %s167 = scalar_select %p166, %s165, 63
        %s168 = smul.addr %s167, 4
        %s169 = scalar_lea.vmem %s0, %s168
        %p170 = pneg %p37
        %p171 = pneg %p34
        %p172 = pneg %p58
        %p173 = pneg %p55
        %p174 = pneg %p79
        %p175 = pneg %p76
        %p176 = pneg %p100
        %p177 = pneg %p97
        %p178 = pneg %p121
        %p179 = pneg %p118
        %s180 = smul.u32 16, %s16
        %p181 = scmp.lt.s32.totalorder %s180, 63
        %s182 = scalar_select %p181, %s180, 63
        %s183 = smul.addr %s182, 4
        %s184 = scalar_lea.vmem %s0, %s183
        %s185 = smul.u32 16, %s16
        %p187 = scmp.eq.s32.totalorder %s16, 0
        // Predicated region
        $region37: #{tpu_custom_call.1} parent=35 // pred_check
          %p188 = pneg %p187
        $region38: #{tpu_custom_call.1} parent=35 // pred_check_branch
          %190 = sbr.rel (%p188) target = $region40
        $region39: #{tpu_custom_call.1} parent=35 // pred_region
          %191 = vst [vmem:[#allocation2] sm:$0x1] 0.0
          %192 = vst [vmem:[#allocation3] sm:$0x1] 0.0
          %193 = vst [vmem:[#allocation4] sm:$0x3] 0.0
        $region40: #{tpu_custom_call.1} parent=35 // pred_fallthru
          _
        %v194 = vld [vmem:[%s184] sm:$0xf]
        %v195 = vld [vmem:[%s184 + $0x4] sm:$0xf]
        %v196 = vld [vmem:[%s184 + $0x8] sm:$0xf]
        %v197 = vld [vmem:[%s184 + $0xc] sm:$0xf]
        %v198 = vld [vmem:[%s184 + $0x10] sm:$0xf]
        %v199 = vld [vmem:[%s184 + $0x14] sm:$0xf]
        %v200 = vld [vmem:[%s184 + $0x18] sm:$0xf]
        %v201 = vld [vmem:[%s184 + $0x1c] sm:$0xf]
        %v202 = vld [vmem:[%s184 + $0x20] sm:$0xf]
        %v203 = vld [vmem:[%s184 + $0x24] sm:$0xf]
        %v204 = vld [vmem:[%s184 + $0x28] sm:$0xf]
        %v205 = vld [vmem:[%s184 + $0x2c] sm:$0xf]
        %v206 = vld [vmem:[%s184 + $0x30] sm:$0xf]
        %v207 = vld [vmem:[%s184 + $0x34] sm:$0xf]
        %v208 = vld [vmem:[%s184 + $0x38] sm:$0xf]
        %v209 = vld [vmem:[%s184 + $0x3c] sm:$0xf]
        %v210 = vld [vmem:[%s1] sm:$0xf]
        %v211 = vld [vmem:[%s1 + $0x4] sm:$0xf]
        %v212 = vld [vmem:[%s1 + $0x8] sm:$0xf]
        %v213 = vld [vmem:[%s1 + $0xc] sm:$0xf]
        %v214 = vld [vmem:[%s1 + $0x10] sm:$0x3]
        %v231 = vunpack.c.l.b16 %v194
        %v232 = vunpack.c.l.b16 %v195
        %v233 = vunpack.c.l.b16 %v196
        %v234 = vunpack.c.l.b16 %v197
        %v235 = vunpack.c.l.b16 %v198
        %v236 = vunpack.c.l.b16 %v199
        %v237 = vunpack.c.l.b16 %v200
        %v238 = vunpack.c.l.b16 %v201
        %v239 = vunpack.c.l.b16 %v202
        %v240 = vunpack.c.l.b16 %v203
        %v241 = vunpack.c.l.b16 %v204
        %v242 = vunpack.c.l.b16 %v205
        %v243 = vunpack.c.l.b16 %v206
        %v244 = vunpack.c.l.b16 %v207
        %v245 = vunpack.c.l.b16 %v208
        %v246 = vunpack.c.l.b16 %v209
        %v247 = vpack.c.b16 %v232, %v231
        %v248 = vpack.c.b16 %v234, %v233
        %v249 = vpack.c.b16 %v236, %v235
        %v250 = vpack.c.b16 %v238, %v237
        %v251 = vpack.c.b16 %v240, %v239
        %v252 = vpack.c.b16 %v242, %v241
        %v253 = vpack.c.b16 %v244, %v243
        %v254 = vpack.c.b16 %v246, %v245
        %v260 = vunpack.c.l.b16 %v210
        %v261 = vunpack.c.l.b16 %v211
        %v262 = vunpack.c.l.b16 %v212
        %v263 = vunpack.c.l.b16 %v213
        %v264 = vunpack.c.l.b16 %v214
        %v265 = vpack.c.b16 %v261, %v260
        %v266 = vpack.c.b16 %v263, %v262
        %v267 = vpack.c.b16 %v264, %v264
        %vm270 = vcmask 293888
        %v272 = vsel %vm270, %v247, 0
        %v275 = vsel %vm270, %v248, 0
        %v278 = vsel %vm270, %v249, 0
        %v281 = vsel %vm270, %v250, 0
        %v284 = vsel %vm270, %v251, 0
        %v287 = vsel %vm270, %v252, 0
        %v290 = vsel %vm270, %v253, 0
        %v293 = vsel %vm270, %v254, 0
        %vm295 = vcmask 1041408
        %v297 = vsel %vm295, %v267, 0
        %299 = vmatprep.subr.bf16.mxu0 0
        %300 = vmatpush1.bf16.msra.mxu0 0
        %301 = vmatprep.subr.bf16.mxu0 0
        %302 = vmatpush1.bf16.msra.mxu0 0
        %303 = vmatprep.subr.bf16.mxu0 0
        %304 = vmatpush1.bf16.msra.mxu0 0
        %305 = vmatprep.subr.bf16.mxu0 0
        %306 = vmatpush1.bf16.msra.mxu0 0
        %307 = vmatprep.subr.bf16.mxu0 0
        %308 = vmatpush1.bf16.msra.mxu0 0
        %309 = vmatprep.subr.bf16.mxu0 0
        %310 = vmatpush1.bf16.msra.mxu0 %v297
        %311 = vmatprep.subr.bf16.mxu0 0
        %312 = vmatpush1.bf16.msra.mxu0 %v266
        %313 = vmatprep.subr.bf16.mxu0 0
        %314 = vmatpush1.bf16.msra.mxu0 %v265
        %315 = vmatprep.subr.bf16.mxu0 0
        %316 = vmatpush2.bf16.msra.mxu0 0
        %317 = vmatprep.subr.bf16.mxu0 0
        %318 = vmatpush2.bf16.msra.mxu0 0
        %319 = vmatprep.subr.bf16.mxu0 0
        %320 = vmatpush2.bf16.msra.mxu0 0
        %321 = vmatprep.subr.bf16.mxu0 0
        %322 = vmatpush2.bf16.msra.mxu0 0
        %323 = vmatprep.subr.bf16.mxu0 0
        %324 = vmatpush2.bf16.msra.mxu0 0
        %325 = vmatprep.subr.bf16.mxu0 0
        %326 = vmatpush2.bf16.msra.mxu0 0
        %327 = vmatprep.subr.bf16.mxu0 0
        %328 = vmatpush2.bf16.msra.mxu0 0
        %329 = vmatprep.subr.bf16.mxu0 0
        %330 = vmatpush2.bf16.msra.mxu0 0
        %331 = vmatprep.mubr.bf16.mxu0 0
        %332 = vmatmul.mubr.bf16.gmra.mxu0 %v272
        %v333 = vpop.f32.mrf.mxu0
        %v334 = vadd.f32 0.0, %v333
        %v335 = vpop.f32.mrf.mxu0
        %v336 = vpop.f32.mrf.mxu0
        %v337 = vadd.f32 0.0, %v336
        %v338 = vpop.f32.mrf.mxu0
        %339 = vmatprep.mubr.bf16.mxu0 0
        %340 = vmatmul.mubr.bf16.gmra.mxu0 %v275
        %v341 = vpop.f32.mrf.mxu0
        %v342 = vadd.f32 0.0, %v341
        %v343 = vpop.f32.mrf.mxu0
        %v344 = vpop.f32.mrf.mxu0
        %v345 = vadd.f32 0.0, %v344
        %v346 = vpop.f32.mrf.mxu0
        %347 = vmatprep.mubr.bf16.mxu0 0
        %348 = vmatmul.mubr.bf16.gmra.mxu0 %v278
        %v349 = vpop.f32.mrf.mxu0
        %v350 = vadd.f32 0.0, %v349
        %v351 = vpop.f32.mrf.mxu0
        %v352 = vpop.f32.mrf.mxu0
        %v353 = vadd.f32 0.0, %v352
        %v354 = vpop.f32.mrf.mxu0
        %355 = vmatprep.mubr.bf16.mxu0 0
        %356 = vmatmul.mubr.bf16.gmra.mxu0 %v281
        %v357 = vpop.f32.mrf.mxu0
        %v358 = vadd.f32 0.0, %v357
        %v359 = vpop.f32.mrf.mxu0
        %v360 = vpop.f32.mrf.mxu0
        %v361 = vadd.f32 0.0, %v360
        %v362 = vpop.f32.mrf.mxu0
        %363 = vmatprep.mubr.bf16.mxu0 0
        %364 = vmatmul.mubr.bf16.gmra.mxu0 %v284
        %v365 = vpop.f32.mrf.mxu0
        %v366 = vadd.f32 0.0, %v365
        %v367 = vpop.f32.mrf.mxu0
        %v368 = vpop.f32.mrf.mxu0
        %v369 = vadd.f32 0.0, %v368
        %v370 = vpop.f32.mrf.mxu0
        %371 = vmatprep.mubr.bf16.mxu0 0
        %372 = vmatmul.mubr.bf16.gmra.mxu0 %v287
        %v373 = vpop.f32.mrf.mxu0
        %v374 = vadd.f32 0.0, %v373
        %v375 = vpop.f32.mrf.mxu0
        %v376 = vpop.f32.mrf.mxu0
        %v377 = vadd.f32 0.0, %v376
        %v378 = vpop.f32.mrf.mxu0
        %379 = vmatprep.mubr.bf16.mxu0 0
        %380 = vmatmul.mubr.bf16.gmra.mxu0 %v290
        %v381 = vpop.f32.mrf.mxu0
        %v382 = vadd.f32 0.0, %v381
        %v383 = vpop.f32.mrf.mxu0
        %v384 = vpop.f32.mrf.mxu0
        %v385 = vadd.f32 0.0, %v384
        %v386 = vpop.f32.mrf.mxu0
        %387 = vmatprep.mubr.bf16.mxu0 0
        %388 = vmatmul.mubr.bf16.gmra.mxu0 %v293
        %v389 = vpop.f32.mrf.mxu0
        %v390 = vadd.f32 0.0, %v389
        %v391 = vpop.f32.mrf.mxu0
        %v392 = vpop.f32.mrf.mxu0
        %v393 = vadd.f32 0.0, %v392
        %v394 = vpop.f32.mrf.mxu0
        %395 = vdwg.mxu0
        %v396 = vld [vmem:[#allocation2] sm:$0x1]
        %v397 = vadd.f32 %v334, %v337
        %v398 = vadd.f32 %v397, %v342
        %v399 = vadd.f32 %v398, %v345
        %v400 = vadd.f32 %v399, %v350
        %v401 = vadd.f32 %v400, %v353
        %v402 = vadd.f32 %v401, %v358
        %v403 = vadd.f32 %v402, %v361
        %v404 = vadd.f32 %v403, %v366
        %v405 = vadd.f32 %v404, %v369
        %v406 = vadd.f32 %v405, %v374
        %v407 = vadd.f32 %v406, %v377
        %v408 = vadd.f32 %v407, %v382
        %v409 = vadd.f32 %v408, %v385
        %v410 = vadd.f32 %v409, %v390
        %v411 = vadd.f32 %v410, %v393
        %v412 = vrot.slane %v411, 4
        %v413 = vadd.f32 %v411, %v412
        %v414 = vrot.slane %v413, 2
        %v415 = vadd.f32 %v413, %v414
        %v416 = vrot.slane %v415, 1
        %v417 = vadd.f32 %v415, %v416
        %v418 = vadd.f32 %v396, %v417
        %419 = vst [vmem:[#allocation2] sm:$0x1] %v418
        %v420 = vld [vmem:[#allocation3] sm:$0x1]
        %v421 = vmul.f32 %v334, %v334
        %v422 = vmul.f32 %v337, %v337
        %v423 = vmul.f32 %v342, %v342
        %v424 = vmul.f32 %v345, %v345
        %v425 = vmul.f32 %v350, %v350
        %v426 = vmul.f32 %v353, %v353
        %v427 = vmul.f32 %v358, %v358
        %v428 = vmul.f32 %v361, %v361
        %v429 = vmul.f32 %v366, %v366
        %v430 = vmul.f32 %v369, %v369
        %v431 = vmul.f32 %v374, %v374
        %v432 = vmul.f32 %v377, %v377
        %v433 = vmul.f32 %v382, %v382
        %v434 = vmul.f32 %v385, %v385
        %v435 = vmul.f32 %v390, %v390
        %v436 = vmul.f32 %v393, %v393
        %v437 = vadd.f32 %v421, %v422
        %v438 = vadd.f32 %v437, %v423
        %v439 = vadd.f32 %v438, %v424
        %v440 = vadd.f32 %v439, %v425
        %v441 = vadd.f32 %v440, %v426
        %v442 = vadd.f32 %v441, %v427
        %v443 = vadd.f32 %v442, %v428
        %v444 = vadd.f32 %v443, %v429
        %v445 = vadd.f32 %v444, %v430
        %v446 = vadd.f32 %v445, %v431
        %v447 = vadd.f32 %v446, %v432
        %v448 = vadd.f32 %v447, %v433
        %v449 = vadd.f32 %v448, %v434
        %v450 = vadd.f32 %v449, %v435
        %v451 = vadd.f32 %v450, %v436
        %v452 = vrot.slane %v451, 4
        %v453 = vadd.f32 %v451, %v452
        %v454 = vrot.slane %v453, 2
        %v455 = vadd.f32 %v453, %v454
        %v456 = vrot.slane %v455, 1
        %v457 = vadd.f32 %v455, %v456
        %v458 = vadd.f32 %v420, %v457
        %459 = vst [vmem:[#allocation3] sm:$0x1] %v458
        %p460 = scmp.eq.s32.totalorder %s16, 3
        // Predicated region
        $region41: #{tpu_custom_call.1} parent=35 // pred_check
          %p461 = pneg %p460
        $region42: #{tpu_custom_call.1} parent=35 // pred_check_branch
          %463 = sbr.rel (%p461) target = $region44
        $region43: #{tpu_custom_call.1} parent=35 // pred_region
          %v464 = vld [vmem:[#allocation2] sm:$0x1]
          %v465 = vmul.f32 %v464, 0.001953125
          %v466 = vld [vmem:[#allocation3] sm:$0x1]
          %v467 = vmul.f32 %v466, 0.001953125
          %v468 = vmul.f32 %v465, %v465
          %v469 = vsub.f32 %v467, %v468
          %v470 = vadd.f32 %v469, 1e-05
          %v471 = vrsqrt.pop %v470
          %v472 = vld [vmem:[%s2] sm:$0x1]
          %v473 = vmul.f32 %v472, %v471
          %v474 = vld [vmem:[%s3] sm:$0x1]
          %v475 = vmul.f32 %v465, %v473
          %v476 = vsub.f32 %v474, %v475
          %477 = vst [vmem:[#allocation4] sm:$0x1] %v473
          %478 = vst [vmem:[#allocation4 + $0x1] sm:$0x1] %v476
        $region44: #{tpu_custom_call.1} parent=35 // pred_fallthru
          _
        // Predicated region
        $region45: #{tpu_custom_call.1} parent=35 // pred_check
          %p479 = pneg %p118
        $region46: #{tpu_custom_call.1} parent=35 // pred_check_branch
          %481 = sbr.rel (%p479) target = $region48
        $region47: #{tpu_custom_call.1} parent=35 // pred_region
          %s483 = ssub.s32 32, 32
          %484 = vsyncadd [#allocation5], %s483
          %s486 = sshll.u32 [#allocation4], 4
          %s487 = int_to_ptr.vmem [resolvable:$true] %s486
          %489 = dma.vmem_to_hbm [thread:$0]  %s487, 32, %s4, [#allocation5]
        $region48: #{tpu_custom_call.1} parent=35 // pred_fallthru
          _
        // Predicated region
        $region49: #{tpu_custom_call.1} parent=35 // pred_check
          %p490 = pneg %p118
        $region50: #{tpu_custom_call.1} parent=35 // pred_check_branch
          %492 = sbr.rel (%p490) target = $region52
        $region51: #{tpu_custom_call.1} parent=35 // pred_region
          %493 = dma.done [#allocation5], 32
        $region52: #{tpu_custom_call.1} parent=35 // pred_fallthru
          _
      $region36: #{tpu_custom_call.1} parent=5 // pred_fallthru
        _
      %p494 = scmp.le.s32.totalorder 2, %s11
      // Predicated region
      $region53: #{tpu_custom_call.1} parent=5 // pred_check
        %p495 = pneg %p494
      $region54: #{tpu_custom_call.1} parent=5 // pred_check_branch
        %497 = sbr.rel (%p495) target = $region56
      $region55: #{tpu_custom_call.1} parent=5 // pred_region
        %s498 = ssub.s32 %s11, 2
      $region56: #{tpu_custom_call.1} parent=5 // pred_fallthru
        _
    $region6: #{tpu_custom_call.1} parent=1 // loop_footer
      %s15 = sadd.s32 1, %s11
    $region7: #{tpu_custom_call.1} parent=1 // loop_footer_branch
      %10 = sbr.rel target = $region3
    $region8: #{tpu_custom_call.1} parent=1 // loop_exit
      _
    %499 = vsyncpa [#allocation5], 1
    %s500 = scalar_lea.sflag [#allocation5], 1
    %501 = vsyncpa %s500, 1

</llo_original>
